<compile_context>
chip_gen: v6e
topology: v6e:2x2x1
jax: 0.10.0
libtpu: 0.0.40
codegen_flags: <defaults>
</compile_context>

<pallas_src>
import functools

import jax
import jax.numpy as jnp
from jax.experimental import pallas as pl
from jax.experimental.pallas import tpu as pltpu

NEG_SLOPE = 0.01   # PyTorch nn.LeakyReLU default
HIDDEN = 256


def _leaky_relu(x):
    return jnp.where(x > 0, x, NEG_SLOPE * x)


def _round_up(v, m):
    return (v + m - 1) // m * m


def dqn_kernel(x_ref, w1_ref, b1_ref, w2_ref, b2_ref, w3_ref, b3_ref, o_ref):
    # MXU inputs in bf16, accumulation in f32, bias add + LeakyReLU in f32.
    # The casts / selects ride in spare VPU slots under the MXU pushes.
    x = x_ref[...].astype(jnp.bfloat16)
    h1 = jnp.dot(x, w1_ref[...], preferred_element_type=jnp.float32)
    h1 = _leaky_relu(h1 + b1_ref[...])
    h2 = jnp.dot(h1.astype(jnp.bfloat16), w2_ref[...],
                 preferred_element_type=jnp.float32)
    h2 = _leaky_relu(h2 + b2_ref[...])
    out = jnp.dot(h2.astype(jnp.bfloat16), w3_ref[...],
                  preferred_element_type=jnp.float32)
    o_ref[...] = (out + b3_ref[...]).astype(o_ref.dtype)


def _pick_batch_tile(B, batch_tile):
    """Batch tile: big for throughput, but >=2 (>=4) grid steps for mid-size
    batches so v7x's two TensorCores both get work."""
    if B > batch_tile:
        return batch_tile
    if B >= 256:
        return _round_up(-(-B // 4), 8)   # >=4 steps
    if B >= 64:
        return _round_up(-(-B // 2), 8)   # >=2 steps
    # Tiny batch: one block whose batch dim equals the full array dim (legal
    # even if not a multiple of 8).
    return B


@functools.partial(jax.jit, static_argnames=("batch_tile",))
def dqn_forward(x, params, *, batch_tile=1024):
    """x: (B, input_size) f32 or bf16.
    params: (in, out)-layout bf16 weights + (1, out) f32 biases."""
    w1, b1 = params["w1"], params["b1"]
    w2, b2 = params["w2"], params["b2"]
    w3, b3 = params["w3"], params["b3"]

    B, in_size = x.shape
    hidden = w1.shape[1]
    out_size = w3.shape[1]

    tb = _pick_batch_tile(B, batch_tile)
    grid = (pl.cdiv(B, tb),)   # partial last tile handled by Pallas (no pad/slice)

    # Weights / biases: full blocks with a constant index_map -> DMA'd once,
    # stay resident in VMEM across the batch grid.
    def resident(shape):
        n = len(shape)
        return pl.BlockSpec(shape, lambda i: (0,) * n)

    flops = 2 * B * (in_size * hidden + hidden * hidden + hidden * out_size)
    bytes_accessed = (
        B * in_size * x.dtype.itemsize                    # x
        + B * out_size * 4                                # out (f32)
        + w1.size * w1.dtype.itemsize
        + w2.size * w2.dtype.itemsize
        + w3.size * w3.dtype.itemsize
        + (b1.size + b2.size + b3.size) * 4               # f32 biases
    )

    return pl.pallas_call(
        dqn_kernel,
        out_shape=jax.ShapeDtypeStruct((B, out_size), jnp.float32),
        grid=grid,
        in_specs=[
            pl.BlockSpec((tb, in_size), lambda i: (i, 0)),   # x: tiled over batch
            resident(w1.shape), resident(b1.shape),
            resident(w2.shape), resident(b2.shape),
            resident(w3.shape), resident(b3.shape),
        ],
        out_specs=pl.BlockSpec((tb, out_size), lambda i: (i, 0)),
        compiler_params=pltpu.CompilerParams(
            dimension_semantics=("parallel",),
            vmem_limit_bytes=32 * 1024 * 1024),
        cost_estimate=pl.CostEstimate(
            flops=flops, transcendentals=0, bytes_accessed=bytes_accessed),
    )(x, w1, b1, w2, b2, w3, b3)


def init_params(key, input_size, output_size, hidden=HIDDEN):
    """Deterministic synthetic init (PyTorch-Linear-shaped, stored transposed
    as (in, out)); weights pre-converted to bf16 ONCE so there is no per-call
    cast pass."""
    ks = jax.random.split(key, 6)
    s1 = 1.0 / (input_size ** 0.5)
    s2 = 1.0 / (hidden ** 0.5)

    def u(k, shape, s):
        return jax.random.uniform(k, shape, jnp.float32, -s, s)

    return {
        "w1": u(ks[0], (input_size, hidden), s1).astype(jnp.bfloat16),
        "b1": u(ks[1], (1, hidden), s1),
        "w2": u(ks[2], (hidden, hidden), s2).astype(jnp.bfloat16),
        "b2": u(ks[3], (1, hidden), s2),
        "w3": u(ks[4], (hidden, output_size), s2).astype(jnp.bfloat16),
        "b3": u(ks[5], (1, output_size), s2),
    }


def dqn_reference(x, p):
    """Pure-JAX reference mirroring the kernel numerics (bf16 MXU inputs,
    f32 accumulation).  Note: bf16 weights deviate from a pure-f32 PyTorch DQN
    by ~1e-2 relative error (acceptable for inference)."""
    def mxu_dot(a, b):
        return jnp.dot(a.astype(jnp.bfloat16), b.astype(jnp.bfloat16),
                       preferred_element_type=jnp.float32)
    h1 = _leaky_relu(mxu_dot(x, p["w1"]) + p["b1"])
    h2 = _leaky_relu(mxu_dot(h1, p["w2"]) + p["b2"])
    return mxu_dot(h2, p["w3"]) + p["b3"]


if __name__ == "__main__":
    key = jax.random.PRNGKey(0)
    k_x, k_p, k_x2 = jax.random.split(key, 3)

    batch, input_size, output_size = 8, 32, 8
    params = init_params(k_p, input_size, output_size)

    # Small inference batch: single block equal to the full batch dim.
    x = jax.random.normal(k_x, (batch, input_size), jnp.float32)
    out = jax.block_until_ready(dqn_forward(x, params))
    ref = dqn_reference(x, params)
    assert out.shape == (batch, output_size)
    assert jnp.allclose(out, ref, atol=1e-2, rtol=1e-2), \
        float(jnp.max(jnp.abs(out - ref)))

    # Mid-size batch: split into >=4 grid steps with a partial last tile
    # (exercises megacore sharding + boundary clipping, no pad/slice passes).
    batch2 = 300
    x2 = jax.random.normal(k_x2, (batch2, input_size), jnp.float32)
    out2 = jax.block_until_ready(dqn_forward(x2, params))
    ref2 = dqn_reference(x2, params)
    assert out2.shape == (batch2, output_size)
    assert jnp.allclose(out2, ref2, atol=1e-2, rtol=1e-2), \
        float(jnp.max(jnp.abs(out2 - ref2)))

    # Explicit multi-tile pipelined grid (B > batch_tile) with a partial last tile.
    out3 = jax.block_until_ready(dqn_forward(x2, params, batch_tile=128))
    assert out3.shape == (batch2, output_size)
    assert jnp.allclose(out3, ref2, atol=1e-2, rtol=1e-2), \
        float(jnp.max(jnp.abs(out3 - ref2)))

    print("KERNEL_OK")
</pallas_src>

<mosaic_0001>
module attributes {stable_mosaic.version = 11 : i64} {
  func.func @dqn_kernel(%arg0: i32, %arg1: memref<8x32xf32, #tpu.memory_space<vmem>>, %arg2: memref<32x256xbf16, #tpu.memory_space<vmem>>, %arg3: memref<1x256xf32, #tpu.memory_space<vmem>>, %arg4: memref<256x256xbf16, #tpu.memory_space<vmem>>, %arg5: memref<1x256xf32, #tpu.memory_space<vmem>>, %arg6: memref<256x8xbf16, #tpu.memory_space<vmem>>, %arg7: memref<1x8xf32, #tpu.memory_space<vmem>>, %arg8: memref<8x8xf32, #tpu.memory_space<vmem>>) attributes {dimension_semantics = [#tpu.dimension_semantics<parallel>], iteration_bounds = array<i64: 1>, scalar_prefetch = 0 : i64, scratch_operands = 0 : i64, tpu.core_type = #tpu.core_type<tc>, window_params = [{transform_indices = @transform_0, window_bounds = array<i64: 8, 32>}, {pipeline_mode = #tpu.pipeline_mode<synchronous>, transform_indices = @transform_1, window_bounds = array<i64: 32, 256>}, {pipeline_mode = #tpu.pipeline_mode<synchronous>, transform_indices = @transform_2, window_bounds = array<i64: 1, 256>}, {pipeline_mode = #tpu.pipeline_mode<synchronous>, transform_indices = @transform_3, window_bounds = array<i64: 256, 256>}, {pipeline_mode = #tpu.pipeline_mode<synchronous>, transform_indices = @transform_4, window_bounds = array<i64: 1, 256>}, {pipeline_mode = #tpu.pipeline_mode<synchronous>, transform_indices = @transform_5, window_bounds = array<i64: 256, 8>}, {pipeline_mode = #tpu.pipeline_mode<synchronous>, transform_indices = @transform_6, window_bounds = array<i64: 1, 8>}, {transform_indices = @transform_7, window_bounds = array<i64: 8, 8>}]} {
    %c0 = arith.constant 0 : index
    %c0_0 = arith.constant 0 : index
    %0 = vector.load %arg1[%c0, %c0_0] : memref<8x32xf32, #tpu.memory_space<vmem>>, vector<8x32xf32>
    %1 = arith.truncf %0 : vector<8x32xf32> to vector<8x32xbf16>
    %c0_1 = arith.constant 0 : index
    %c0_2 = arith.constant 0 : index
    %2 = vector.load %arg2[%c0_1, %c0_2] : memref<32x256xbf16, #tpu.memory_space<vmem>>, vector<32x256xbf16>
    %cst = arith.constant dense<0.000000e+00> : vector<8x256xf32>
    %3 = tpu.matmul %1, %2, %cst {dimension_numbers = #tpu.dot_dimension_numbers<[1], [0], [0], [1], [0, 0, 1, 1], [], []>} : vector<8x32xbf16>, vector<32x256xbf16>, vector<8x256xf32> -> vector<8x256xf32>
    %c0_3 = arith.constant 0 : index
    %c0_4 = arith.constant 0 : index
    %4 = vector.load %arg3[%c0_3, %c0_4] : memref<1x256xf32, #tpu.memory_space<vmem>>, vector<1x256xf32>
    %5 = vector.broadcast %4 : vector<1x256xf32> to vector<8x256xf32>
    %6 = arith.addf %3, %5 : vector<8x256xf32>
    %cst_5 = arith.constant 0.000000e+00 : f32
    %7 = vector.broadcast %cst_5 : f32 to vector<8x256xf32>
    %8 = arith.cmpf ogt, %6, %7 : vector<8x256xf32>
    %cst_6 = arith.constant 0.00999999977 : f32
    %9 = vector.broadcast %cst_6 : f32 to vector<8x256xf32>
    %10 = arith.mulf %9, %6 : vector<8x256xf32>
    %11 = arith.select %8, %6, %10 : vector<8x256xi1>, vector<8x256xf32>
    %12 = arith.truncf %11 : vector<8x256xf32> to vector<8x256xbf16>
    %c0_7 = arith.constant 0 : index
    %c0_8 = arith.constant 0 : index
    %13 = vector.load %arg4[%c0_7, %c0_8] : memref<256x256xbf16, #tpu.memory_space<vmem>>, vector<256x256xbf16>
    %cst_9 = arith.constant dense<0.000000e+00> : vector<8x256xf32>
    %14 = tpu.matmul %12, %13, %cst_9 {dimension_numbers = #tpu.dot_dimension_numbers<[1], [0], [0], [1], [0, 0, 1, 1], [], []>} : vector<8x256xbf16>, vector<256x256xbf16>, vector<8x256xf32> -> vector<8x256xf32>
    %c0_10 = arith.constant 0 : index
    %c0_11 = arith.constant 0 : index
    %15 = vector.load %arg5[%c0_10, %c0_11] : memref<1x256xf32, #tpu.memory_space<vmem>>, vector<1x256xf32>
    %16 = vector.broadcast %15 : vector<1x256xf32> to vector<8x256xf32>
    %17 = arith.addf %14, %16 : vector<8x256xf32>
    %cst_12 = arith.constant 0.000000e+00 : f32
    %18 = vector.broadcast %cst_12 : f32 to vector<8x256xf32>
    %19 = arith.cmpf ogt, %17, %18 : vector<8x256xf32>
    %cst_13 = arith.constant 0.00999999977 : f32
    %20 = vector.broadcast %cst_13 : f32 to vector<8x256xf32>
    %21 = arith.mulf %20, %17 : vector<8x256xf32>
    %22 = arith.select %19, %17, %21 : vector<8x256xi1>, vector<8x256xf32>
    %23 = arith.truncf %22 : vector<8x256xf32> to vector<8x256xbf16>
    %c0_14 = arith.constant 0 : index
    %c0_15 = arith.constant 0 : index
    %24 = vector.load %arg6[%c0_14, %c0_15] : memref<256x8xbf16, #tpu.memory_space<vmem>>, vector<256x8xbf16>
    %cst_16 = arith.constant dense<0.000000e+00> : vector<8x8xf32>
    %25 = tpu.matmul %23, %24, %cst_16 {dimension_numbers = #tpu.dot_dimension_numbers<[1], [0], [0], [1], [0, 0, 1, 1], [], []>} : vector<8x256xbf16>, vector<256x8xbf16>, vector<8x8xf32> -> vector<8x8xf32>
    %c0_17 = arith.constant 0 : index
    %c0_18 = arith.constant 0 : index
    %26 = vector.load %arg7[%c0_17, %c0_18] : memref<1x8xf32, #tpu.memory_space<vmem>>, vector<1x8xf32>
    %27 = vector.broadcast %26 : vector<1x8xf32> to vector<8x8xf32>
    %28 = arith.addf %25, %27 : vector<8x8xf32>
    %c0_19 = arith.constant 0 : index
    %c0_20 = arith.constant 0 : index
    %29 = vector.load %arg8[%c0_19, %c0_20] : memref<8x8xf32, #tpu.memory_space<vmem>>, vector<8x8xf32>
    tpu.vector_store %arg8[%c0_19, %c0_20], %28 {strides = array<i32>} : memref<8x8xf32, #tpu.memory_space<vmem>>, vector<8x8xf32>,
    return
  }
  func.func @transform_0(%arg0: i32) -> (i32, i32) {
    %c0_i32 = arith.constant 0 : i32
    %c0_i32_0 = arith.constant 0 : i32
    return %arg0, %c0_i32 : i32, i32
  }
  func.func @transform_1(%arg0: i32) -> (i32, i32) {
    %c0_i32 = arith.constant 0 : i32
    %c0_i32_0 = arith.constant 0 : i32
    %c0_i32_1 = arith.constant 0 : i32
    return %c0_i32, %c0_i32_0 : i32, i32
  }
  func.func @transform_2(%arg0: i32) -> (i32, i32) {
    %c0_i32 = arith.constant 0 : i32
    %c0_i32_0 = arith.constant 0 : i32
    %c0_i32_1 = arith.constant 0 : i32
    return %c0_i32, %c0_i32_0 : i32, i32
  }
  func.func @transform_3(%arg0: i32) -> (i32, i32) {
    %c0_i32 = arith.constant 0 : i32
    %c0_i32_0 = arith.constant 0 : i32
    %c0_i32_1 = arith.constant 0 : i32
    return %c0_i32, %c0_i32_0 : i32, i32
  }
  func.func @transform_4(%arg0: i32) -> (i32, i32) {
    %c0_i32 = arith.constant 0 : i32
    %c0_i32_0 = arith.constant 0 : i32
    %c0_i32_1 = arith.constant 0 : i32
    return %c0_i32, %c0_i32_0 : i32, i32
  }
  func.func @transform_5(%arg0: i32) -> (i32, i32) {
    %c0_i32 = arith.constant 0 : i32
    %c0_i32_0 = arith.constant 0 : i32
    %c0_i32_1 = arith.constant 0 : i32
    return %c0_i32, %c0_i32_0 : i32, i32
  }
  func.func @transform_6(%arg0: i32) -> (i32, i32) {
    %c0_i32 = arith.constant 0 : i32
    %c0_i32_0 = arith.constant 0 : i32
    %c0_i32_1 = arith.constant 0 : i32
    return %c0_i32, %c0_i32_0 : i32, i32
  }
  func.func @transform_7(%arg0: i32) -> (i32, i32) {
    %c0_i32 = arith.constant 0 : i32
    %c0_i32_0 = arith.constant 0 : i32
    return %arg0, %c0_i32 : i32, i32
  }
}

</mosaic_0001>

<llo_original>
// kernel: dqn_forward.1
$region0: #{dqn_forward.1}
  #allocation0 [shape = 'u32[]', space=smem, size = 0x4, offset = 0x4, fixed_abs, tag = 'smem constant byte address 0x4 - core index']
  #allocation1 [shape = 'u32[144,128]{1,0:T(1,128)}', space=vmem, size = 0x12000, scoped, tag = 'internal scratch']
  %s0 = inlined_call_operand.vmem [shape: f32[8,32], index: 0, kind: input, shape index: {}]
  %s1 = inlined_call_operand.vmem [shape: bf16[32,256], index: 1, kind: input, shape index: {}]
  %s2 = inlined_call_operand.vmem [shape: f32[1,256], index: 2, kind: input, shape index: {}]
  %s3 = inlined_call_operand.hbm [shape: bf16[256,256], index: 3, kind: input, shape index: {}]
  %s4 = inlined_call_operand.vmem [shape: f32[1,256], index: 4, kind: input, shape index: {}]
  %s5 = inlined_call_operand.vmem [shape: bf16[256,8], index: 5, kind: input, shape index: {}]
  %s6 = inlined_call_operand.vmem [shape: f32[1,8], index: 6, kind: input, shape index: {}]
  %s7 = inlined_call_operand.hbm [shape: f32[8,8], index: 7, kind: output, shape index: {}]
  %s8 = sld [smem:[#allocation0]]
  $region42: #{dqn_forward.1} parent=0
    _
  %s10 = ssub.s32 1, %s8
  %s11 = scalar_select 0, %s10, %s8
  $region1: #{dqn_forward.1} parent=0
    #allocation2 [shape = 'u8[131072]{0}', space=vmem, size = 0x20000, scoped, tag = 'input window, operand 3, single buffered']
    #allocation3 [shape = 's32[1]{0}', space=sflag, size = 0x4, scoped, tag = 'scoped memory for dqn_forward.1']
    #allocation4 [shape = 's32[1]{0}', space=sflag, size = 0x4, scoped, tag = 'scoped memory for dqn_forward.1']
    #allocation5 [shape = 'u8[4096]{0}', space=vmem, size = 0x1000, scoped, tag = 'output window, operand 0, single buffered']
    %12 = vsyncpa [#allocation3], 0
    %13 = vsyncpa [#allocation4], 0
    // Predicated region
    $region2: #{dqn_forward.1} parent=1 // pred_check
      _
    $region3: #{dqn_forward.1} parent=1 // pred_check_branch
      %15 = sbr.rel (0) target = $region5
    $region4: #{dqn_forward.1} parent=1 // pred_region
      _
    $region5: #{dqn_forward.1} parent=1 // pred_fallthru
      _
    // Predicated region
    $region6: #{dqn_forward.1} parent=1 // pred_check
      _
    $region7: #{dqn_forward.1} parent=1 // pred_check_branch
      %17 = sbr.rel (0) target = $region9
    $region8: #{dqn_forward.1} parent=1 // pred_region
      _
    $region9: #{dqn_forward.1} parent=1 // pred_fallthru
      _
    // Predicated region
    $region10: #{dqn_forward.1} parent=1 // pred_check
      _
    $region11: #{dqn_forward.1} parent=1 // pred_check_branch
      %19 = sbr.rel (0) target = $region13
    $region12: #{dqn_forward.1} parent=1 // pred_region
      _
    $region13: #{dqn_forward.1} parent=1 // pred_fallthru
      _
    // Predicated region
    $region14: #{dqn_forward.1} parent=1 // pred_check
      _
    $region15: #{dqn_forward.1} parent=1 // pred_check_branch
      %21 = sbr.rel (0) target = $region17
    $region16: #{dqn_forward.1} parent=1 // pred_region
      %s23 = ssub.s32 4096, 4096
      %24 = vsyncadd [#allocation3], %s23
      %s25 = sshll.u32 [#allocation2], 4
      %s26 = int_to_ptr.vmem [resolvable:$true] %s25
      %31 = dma.hbm_to_vmem [thread:$0]  %s3, 4096, %s26, [#allocation3], 128, 128, 8
    $region17: #{dqn_forward.1} parent=1 // pred_fallthru
      _
    // Predicated region
    $region18: #{dqn_forward.1} parent=1 // pred_check
      _
    $region19: #{dqn_forward.1} parent=1 // pred_check_branch
      %33 = sbr.rel (0) target = $region21
    $region20: #{dqn_forward.1} parent=1 // pred_region
      _
    $region21: #{dqn_forward.1} parent=1 // pred_fallthru
      _
    // Predicated region
    $region22: #{dqn_forward.1} parent=1 // pred_check
      _
    $region23: #{dqn_forward.1} parent=1 // pred_check_branch
      %35 = sbr.rel (0) target = $region25
    $region24: #{dqn_forward.1} parent=1 // pred_region
      _
    $region25: #{dqn_forward.1} parent=1 // pred_fallthru
      _
    // Predicated region
    $region26: #{dqn_forward.1} parent=1 // pred_check
      _
    $region27: #{dqn_forward.1} parent=1 // pred_check_branch
      %37 = sbr.rel (0) target = $region29
    $region28: #{dqn_forward.1} parent=1 // pred_region
      _
    $region29: #{dqn_forward.1} parent=1 // pred_fallthru
      _
    // Predicated region
    $region30: #{dqn_forward.1} parent=1 // pred_check
      _
    $region31: #{dqn_forward.1} parent=1 // pred_check_branch
      %39 = sbr.rel (0) target = $region33
    $region32: #{dqn_forward.1} parent=1 // pred_region
      %40 = dma.done [#allocation3], 4096
    $region33: #{dqn_forward.1} parent=1 // pred_fallthru
      _
    %v42 = vld [vmem:[%s0] sm:$0xff]
    %v43 = vpack.c.bf16 %v42, %v42
    %v44 = vld [vmem:[%s1] sm:$0xff]
    %v45 = vld [vmem:[%s1 + $0x8] sm:$0xff]
    %v46 = vld [vmem:[%s1 + $0x10] sm:$0xff]
    %v47 = vld [vmem:[%s1 + $0x18] sm:$0xff]
    %v48 = vld [vmem:[%s2] sm:$0x3]
    %v50 = vlaneseq
    %v51 = vshrl.u32 %v50, 7
    %v52 = vsub.s32 0, %v51
    %v53 = vrot.slane %v48, %v52
    %v54 = vlaneseq
    %v55 = vshrl.u32 %v54, 7
    %v56 = vsub.s32 1, %v55
    %v57 = vrot.slane %v48, %v56
    %v64 = vunpack.c.l.b16 %v44
    %v65 = vunpack.c.h.b16 %v44
    %v66 = vunpack.c.l.b16 %v45
    %v67 = vunpack.c.h.b16 %v45
    %v68 = vunpack.c.l.b16 %v46
    %v69 = vunpack.c.h.b16 %v46
    %v70 = vunpack.c.l.b16 %v47
    %v71 = vunpack.c.h.b16 %v47
    %v72 = vpack.c.b16 %v66, %v64
    %v73 = vpack.c.b16 %v67, %v65
    %v74 = vpack.c.b16 %v70, %v68
    %v75 = vpack.c.b16 %v71, %v69
    %vm80 = vcmask 261120
    %v82 = vsel %vm80, %v43, 0
    %84 = vmatprep.subr.bf16.mxu0 0
    %85 = vmatpush1.bf16.msra.mxu0 0
    %86 = vmatprep.subr.bf16.mxu0 0
    %87 = vmatpush1.bf16.msra.mxu0 0
    %88 = vmatprep.subr.bf16.mxu0 0
    %89 = vmatpush1.bf16.msra.mxu0 0
    %90 = vmatprep.subr.bf16.mxu0 0
    %91 = vmatpush1.bf16.msra.mxu0 0
    %92 = vmatprep.subr.bf16.mxu0 0
    %93 = vmatpush1.bf16.msra.mxu0 0
    %94 = vmatprep.subr.bf16.mxu0 0
    %95 = vmatpush1.bf16.msra.mxu0 0
    %96 = vmatprep.subr.bf16.mxu0 %v75
    %97 = vmatpush1.bf16.msra.mxu0 %v74
    %98 = vmatprep.subr.bf16.mxu0 %v73
    %99 = vmatpush1.bf16.msra.mxu0 %v72
    %100 = vmatprep.subr.bf16.mxu0 0
    %101 = vmatpush2.bf16.msra.mxu0 0
    %102 = vmatprep.subr.bf16.mxu0 0
    %103 = vmatpush2.bf16.msra.mxu0 0
    %104 = vmatprep.subr.bf16.mxu0 0
    %105 = vmatpush2.bf16.msra.mxu0 0
    %106 = vmatprep.subr.bf16.mxu0 0
    %107 = vmatpush2.bf16.msra.mxu0 0
    %108 = vmatprep.subr.bf16.mxu0 0
    %109 = vmatpush2.bf16.msra.mxu0 0
    %110 = vmatprep.subr.bf16.mxu0 0
    %111 = vmatpush2.bf16.msra.mxu0 0
    %112 = vmatprep.subr.bf16.mxu0 0
    %113 = vmatpush2.bf16.msra.mxu0 0
    %114 = vmatprep.subr.bf16.mxu0 0
    %115 = vmatpush2.bf16.msra.mxu0 0
    %116 = vmatprep.mubr.bf16.mxu0 0
    %117 = vmatmul.mubr.bf16.gmra.mxu0 %v82
    %v118 = vpop.f32.mrf.mxu0
    %v119 = vadd.f32 %v53, %v118
    %v120 = vpop.f32.mrf.mxu0
    %v121 = vadd.f32 %v57, %v120
    %v122 = vpop.f32.mrf.mxu0
    %v123 = vpop.f32.mrf.mxu0
    %124 = vdwg.mxu0
    %vm125 = vcmp.gt.f32.partialorder %v119, 0.0
    %vm126 = vcmp.gt.f32.partialorder %v121, 0.0
    %v127 = vmul.f32 %v119, 0.01
    %v128 = vmul.f32 %v121, 0.01
    %v129 = vsel %vm125, %v119, %v127
    %v130 = vsel %vm126, %v121, %v128
    %v131 = vpack.c.bf16 %v129, %v129
    %v132 = vpack.c.bf16 %v130, %v130
    %v133 = vld [vmem:[#allocation2] sm:$0xff]
    %v134 = vld [vmem:[#allocation2 + $0x8] sm:$0xff]
    %v135 = vld [vmem:[#allocation2 + $0x10] sm:$0xff]
    %v136 = vld [vmem:[#allocation2 + $0x18] sm:$0xff]
    %v137 = vld [vmem:[#allocation2 + $0x20] sm:$0xff]
    %v138 = vld [vmem:[#allocation2 + $0x28] sm:$0xff]
    %v139 = vld [vmem:[#allocation2 + $0x30] sm:$0xff]
    %v140 = vld [vmem:[#allocation2 + $0x38] sm:$0xff]
    %v141 = vld [vmem:[#allocation2 + $0x40] sm:$0xff]
    %v142 = vld [vmem:[#allocation2 + $0x48] sm:$0xff]
    %v143 = vld [vmem:[#allocation2 + $0x50] sm:$0xff]
    %v144 = vld [vmem:[#allocation2 + $0x58] sm:$0xff]
    %v145 = vld [vmem:[#allocation2 + $0x60] sm:$0xff]
    %v146 = vld [vmem:[#allocation2 + $0x68] sm:$0xff]
    %v147 = vld [vmem:[#allocation2 + $0x70] sm:$0xff]
    %v148 = vld [vmem:[#allocation2 + $0x78] sm:$0xff]
    %v149 = vld [vmem:[#allocation2 + $0x80] sm:$0xff]
    %v150 = vld [vmem:[#allocation2 + $0x88] sm:$0xff]
    %v151 = vld [vmem:[#allocation2 + $0x90] sm:$0xff]
    %v152 = vld [vmem:[#allocation2 + $0x98] sm:$0xff]
    %v153 = vld [vmem:[#allocation2 + $0xa0] sm:$0xff]
    %v154 = vld [vmem:[#allocation2 + $0xa8] sm:$0xff]
    %v155 = vld [vmem:[#allocation2 + $0xb0] sm:$0xff]
    %v156 = vld [vmem:[#allocation2 + $0xb8] sm:$0xff]
    %v157 = vld [vmem:[#allocation2 + $0xc0] sm:$0xff]
    %v158 = vld [vmem:[#allocation2 + $0xc8] sm:$0xff]
    %v159 = vld [vmem:[#allocation2 + $0xd0] sm:$0xff]
    %v160 = vld [vmem:[#allocation2 + $0xd8] sm:$0xff]
    %v161 = vld [vmem:[#allocation2 + $0xe0] sm:$0xff]
    %v162 = vld [vmem:[#allocation2 + $0xe8] sm:$0xff]
    %v163 = vld [vmem:[#allocation2 + $0xf0] sm:$0xff]
    %v164 = vld [vmem:[#allocation2 + $0xf8] sm:$0xff]
    %v165 = vld [vmem:[%s4] sm:$0x3]
    %v167 = vlaneseq
    %v168 = vshrl.u32 %v167, 7
    %v169 = vsub.s32 0, %v168
    %v170 = vrot.slane %v165, %v169
    %v171 = vlaneseq
    %v172 = vshrl.u32 %v171, 7
    %v173 = vsub.s32 1, %v172
    %v174 = vrot.slane %v165, %v173
    %v209 = vunpack.c.l.b16 %v133
    %v210 = vunpack.c.h.b16 %v133
    %v211 = vunpack.c.l.b16 %v134
    %v212 = vunpack.c.h.b16 %v134
    %v213 = vunpack.c.l.b16 %v135
    %v214 = vunpack.c.h.b16 %v135
    %v215 = vunpack.c.l.b16 %v136
    %v216 = vunpack.c.h.b16 %v136
    %v217 = vunpack.c.l.b16 %v137
    %v218 = vunpack.c.h.b16 %v137
    %v219 = vunpack.c.l.b16 %v138
    %v220 = vunpack.c.h.b16 %v138
    %v221 = vunpack.c.l.b16 %v139
    %v222 = vunpack.c.h.b16 %v139
    %v223 = vunpack.c.l.b16 %v140
    %v224 = vunpack.c.h.b16 %v140
    %v225 = vunpack.c.l.b16 %v141
    %v226 = vunpack.c.h.b16 %v141
    %v227 = vunpack.c.l.b16 %v142
    %v228 = vunpack.c.h.b16 %v142
    %v229 = vunpack.c.l.b16 %v143
    %v230 = vunpack.c.h.b16 %v143
    %v231 = vunpack.c.l.b16 %v144
    %v232 = vunpack.c.h.b16 %v144
    %v233 = vunpack.c.l.b16 %v145
    %v234 = vunpack.c.h.b16 %v145
    %v235 = vunpack.c.l.b16 %v146
    %v236 = vunpack.c.h.b16 %v146
    %v237 = vunpack.c.l.b16 %v147
    %v238 = vunpack.c.h.b16 %v147
    %v239 = vunpack.c.l.b16 %v148
    %v240 = vunpack.c.h.b16 %v148
    %v241 = vunpack.c.l.b16 %v149
    %v242 = vunpack.c.h.b16 %v149
    %v243 = vunpack.c.l.b16 %v150
    %v244 = vunpack.c.h.b16 %v150
    %v245 = vunpack.c.l.b16 %v151
    %v246 = vunpack.c.h.b16 %v151
    %v247 = vunpack.c.l.b16 %v152
    %v248 = vunpack.c.h.b16 %v152
    %v249 = vunpack.c.l.b16 %v153
    %v250 = vunpack.c.h.b16 %v153
    %v251 = vunpack.c.l.b16 %v154
    %v252 = vunpack.c.h.b16 %v154
    %v253 = vunpack.c.l.b16 %v155
    %v254 = vunpack.c.h.b16 %v155
    %v255 = vunpack.c.l.b16 %v156
    %v256 = vunpack.c.h.b16 %v156
    %v257 = vunpack.c.l.b16 %v157
    %v258 = vunpack.c.h.b16 %v157
    %v259 = vunpack.c.l.b16 %v158
    %v260 = vunpack.c.h.b16 %v158
    %v261 = vunpack.c.l.b16 %v159
    %v262 = vunpack.c.h.b16 %v159
    %v263 = vunpack.c.l.b16 %v160
    %v264 = vunpack.c.h.b16 %v160
    %v265 = vunpack.c.l.b16 %v161
    %v266 = vunpack.c.h.b16 %v161
    %v267 = vunpack.c.l.b16 %v162
    %v268 = vunpack.c.h.b16 %v162
    %v269 = vunpack.c.l.b16 %v163
    %v270 = vunpack.c.h.b16 %v163
    %v271 = vunpack.c.l.b16 %v164
    %v272 = vunpack.c.h.b16 %v164
    %v273 = vpack.c.b16 %v211, %v209
    %v274 = vpack.c.b16 %v212, %v210
    %v275 = vpack.c.b16 %v215, %v213
    %v276 = vpack.c.b16 %v216, %v214
    %v277 = vpack.c.b16 %v219, %v217
    %v278 = vpack.c.b16 %v220, %v218
    %v279 = vpack.c.b16 %v223, %v221
    %v280 = vpack.c.b16 %v224, %v222
    %v281 = vpack.c.b16 %v227, %v225
    %v282 = vpack.c.b16 %v228, %v226
    %v283 = vpack.c.b16 %v231, %v229
    %v284 = vpack.c.b16 %v232, %v230
    %v285 = vpack.c.b16 %v235, %v233
    %v286 = vpack.c.b16 %v236, %v234
    %v287 = vpack.c.b16 %v239, %v237
    %v288 = vpack.c.b16 %v240, %v238
    %v289 = vpack.c.b16 %v243, %v241
    %v290 = vpack.c.b16 %v244, %v242
    %v291 = vpack.c.b16 %v247, %v245
    %v292 = vpack.c.b16 %v248, %v246
    %v293 = vpack.c.b16 %v251, %v249
    %v294 = vpack.c.b16 %v252, %v250
    %v295 = vpack.c.b16 %v255, %v253
    %v296 = vpack.c.b16 %v256, %v254
    %v297 = vpack.c.b16 %v259, %v257
    %v298 = vpack.c.b16 %v260, %v258
    %v299 = vpack.c.b16 %v263, %v261
    %v300 = vpack.c.b16 %v264, %v262
    %v301 = vpack.c.b16 %v267, %v265
    %v302 = vpack.c.b16 %v268, %v266
    %v303 = vpack.c.b16 %v271, %v269
    %v304 = vpack.c.b16 %v272, %v270
    %337 = vmatprep.subr.bf16.mxu0 %v288
    %338 = vmatpush1.bf16.msra.mxu0 %v287
    %339 = vmatprep.subr.bf16.mxu0 %v286
    %340 = vmatpush1.bf16.msra.mxu0 %v285
    %341 = vmatprep.subr.bf16.mxu0 %v284
    %342 = vmatpush1.bf16.msra.mxu0 %v283
    %343 = vmatprep.subr.bf16.mxu0 %v282
    %344 = vmatpush1.bf16.msra.mxu0 %v281
    %345 = vmatprep.subr.bf16.mxu0 %v280
    %346 = vmatpush1.bf16.msra.mxu0 %v279
    %347 = vmatprep.subr.bf16.mxu0 %v278
    %348 = vmatpush1.bf16.msra.mxu0 %v277
    %349 = vmatprep.subr.bf16.mxu0 %v276
    %350 = vmatpush1.bf16.msra.mxu0 %v275
    %351 = vmatprep.subr.bf16.mxu0 %v274
    %352 = vmatpush1.bf16.msra.mxu0 %v273
    %353 = vmatprep.subr.bf16.mxu0 %v304
    %354 = vmatpush2.bf16.msra.mxu0 %v303
    %355 = vmatprep.subr.bf16.mxu0 %v302
    %356 = vmatpush2.bf16.msra.mxu0 %v301
    %357 = vmatprep.subr.bf16.mxu0 %v300
    %358 = vmatpush2.bf16.msra.mxu0 %v299
    %359 = vmatprep.subr.bf16.mxu0 %v298
    %360 = vmatpush2.bf16.msra.mxu0 %v297
    %361 = vmatprep.subr.bf16.mxu0 %v296
    %362 = vmatpush2.bf16.msra.mxu0 %v295
    %363 = vmatprep.subr.bf16.mxu0 %v294
    %364 = vmatpush2.bf16.msra.mxu0 %v293
    %365 = vmatprep.subr.bf16.mxu0 %v292
    %366 = vmatpush2.bf16.msra.mxu0 %v291
    %367 = vmatprep.subr.bf16.mxu0 %v290
    %368 = vmatpush2.bf16.msra.mxu0 %v289
    %369 = vmatprep.mubr.bf16.mxu0 %v132
    %370 = vmatmul.mubr.bf16.gmra.mxu0 %v131
    %v371 = vpop.f32.mrf.mxu0
    %v372 = vadd.f32 %v170, %v371
    %v373 = vpop.f32.mrf.mxu0
    %v374 = vadd.f32 %v174, %v373
    %v375 = vpop.f32.mrf.mxu0
    %v376 = vpop.f32.mrf.mxu0
    %377 = vdwg.mxu0
    %vm378 = vcmp.gt.f32.partialorder %v372, 0.0
    %vm379 = vcmp.gt.f32.partialorder %v374, 0.0
    %v380 = vmul.f32 %v372, 0.01
    %v381 = vmul.f32 %v374, 0.01
    %v382 = vsel %vm378, %v372, %v380
    %v383 = vsel %vm379, %v374, %v381
    %v384 = vpack.c.bf16 %v382, %v382
    %v385 = vpack.c.bf16 %v383, %v383
    %v386 = vld [vmem:[%s5] sm:$0xf]
    %v387 = vld [vmem:[%s5 + $0x4] sm:$0xf]
    %v388 = vld [vmem:[%s5 + $0x8] sm:$0xf]
    %v389 = vld [vmem:[%s5 + $0xc] sm:$0xf]
    %v390 = vld [vmem:[%s5 + $0x10] sm:$0xf]
    %v391 = vld [vmem:[%s5 + $0x14] sm:$0xf]
    %v392 = vld [vmem:[%s5 + $0x18] sm:$0xf]
    %v393 = vld [vmem:[%s5 + $0x1c] sm:$0xf]
    %v394 = vld [vmem:[%s5 + $0x20] sm:$0xf]
    %v395 = vld [vmem:[%s5 + $0x24] sm:$0xf]
    %v396 = vld [vmem:[%s5 + $0x28] sm:$0xf]
    %v397 = vld [vmem:[%s5 + $0x2c] sm:$0xf]
    %v398 = vld [vmem:[%s5 + $0x30] sm:$0xf]
    %v399 = vld [vmem:[%s5 + $0x34] sm:$0xf]
    %v400 = vld [vmem:[%s5 + $0x38] sm:$0xf]
    %v401 = vld [vmem:[%s5 + $0x3c] sm:$0xf]
    %v402 = vld [vmem:[%s5 + $0x40] sm:$0xf]
    %v403 = vld [vmem:[%s5 + $0x44] sm:$0xf]
    %v404 = vld [vmem:[%s5 + $0x48] sm:$0xf]
    %v405 = vld [vmem:[%s5 + $0x4c] sm:$0xf]
    %v406 = vld [vmem:[%s5 + $0x50] sm:$0xf]
    %v407 = vld [vmem:[%s5 + $0x54] sm:$0xf]
    %v408 = vld [vmem:[%s5 + $0x58] sm:$0xf]
    %v409 = vld [vmem:[%s5 + $0x5c] sm:$0xf]
    %v410 = vld [vmem:[%s5 + $0x60] sm:$0xf]
    %v411 = vld [vmem:[%s5 + $0x64] sm:$0xf]
    %v412 = vld [vmem:[%s5 + $0x68] sm:$0xf]
    %v413 = vld [vmem:[%s5 + $0x6c] sm:$0xf]
    %v414 = vld [vmem:[%s5 + $0x70] sm:$0xf]
    %v415 = vld [vmem:[%s5 + $0x74] sm:$0xf]
    %v416 = vld [vmem:[%s5 + $0x78] sm:$0xf]
    %v417 = vld [vmem:[%s5 + $0x7c] sm:$0xf]
    %v418 = vld [vmem:[%s6] sm:$0x1]
    %v420 = vlaneseq
    %v421 = vshrl.u32 %v420, 7
    %v422 = vsub.s32 0, %v421
    %v423 = vrot.slane %v418, %v422
    %v457 = vunpack.c.l.b16 %v386
    %v458 = vunpack.c.l.b16 %v387
    %v459 = vunpack.c.l.b16 %v388
    %v460 = vunpack.c.l.b16 %v389
    %v461 = vunpack.c.l.b16 %v390
    %v462 = vunpack.c.l.b16 %v391
    %v463 = vunpack.c.l.b16 %v392
    %v464 = vunpack.c.l.b16 %v393
    %v465 = vunpack.c.l.b16 %v394
    %v466 = vunpack.c.l.b16 %v395
    %v467 = vunpack.c.l.b16 %v396
    %v468 = vunpack.c.l.b16 %v397
    %v469 = vunpack.c.l.b16 %v398
    %v470 = vunpack.c.l.b16 %v399
    %v471 = vunpack.c.l.b16 %v400
    %v472 = vunpack.c.l.b16 %v401
    %v473 = vunpack.c.l.b16 %v402
    %v474 = vunpack.c.l.b16 %v403
    %v475 = vunpack.c.l.b16 %v404
    %v476 = vunpack.c.l.b16 %v405
    %v477 = vunpack.c.l.b16 %v406
    %v478 = vunpack.c.l.b16 %v407
    %v479 = vunpack.c.l.b16 %v408
    %v480 = vunpack.c.l.b16 %v409
    %v481 = vunpack.c.l.b16 %v410
    %v482 = vunpack.c.l.b16 %v411
    %v483 = vunpack.c.l.b16 %v412
    %v484 = vunpack.c.l.b16 %v413
    %v485 = vunpack.c.l.b16 %v414
    %v486 = vunpack.c.l.b16 %v415
    %v487 = vunpack.c.l.b16 %v416
    %v488 = vunpack.c.l.b16 %v417
    %v489 = vpack.c.b16 %v458, %v457
    %v490 = vpack.c.b16 %v460, %v459
    %v491 = vpack.c.b16 %v462, %v461
    %v492 = vpack.c.b16 %v464, %v463
    %v493 = vpack.c.b16 %v466, %v465
    %v494 = vpack.c.b16 %v468, %v467
    %v495 = vpack.c.b16 %v470, %v469
    %v496 = vpack.c.b16 %v472, %v471
    %v497 = vpack.c.b16 %v474, %v473
    %v498 = vpack.c.b16 %v476, %v475
    %v499 = vpack.c.b16 %v478, %v477
    %v500 = vpack.c.b16 %v480, %v479
    %v501 = vpack.c.b16 %v482, %v481
    %v502 = vpack.c.b16 %v484, %v483
    %v503 = vpack.c.b16 %v486, %v485
    %v504 = vpack.c.b16 %v488, %v487
    %521 = vmatprep.subr.bf16.mxu0 0
    %522 = vmatpush1.bf16.msra.mxu0 %v496
    %523 = vmatprep.subr.bf16.mxu0 0
    %524 = vmatpush1.bf16.msra.mxu0 %v495
    %525 = vmatprep.subr.bf16.mxu0 0
    %526 = vmatpush1.bf16.msra.mxu0 %v494
    %527 = vmatprep.subr.bf16.mxu0 0
    %528 = vmatpush1.bf16.msra.mxu0 %v493
    %529 = vmatprep.subr.bf16.mxu0 0
    %530 = vmatpush1.bf16.msra.mxu0 %v492
    %531 = vmatprep.subr.bf16.mxu0 0
    %532 = vmatpush1.bf16.msra.mxu0 %v491
    %533 = vmatprep.subr.bf16.mxu0 0
    %534 = vmatpush1.bf16.msra.mxu0 %v490
    %535 = vmatprep.subr.bf16.mxu0 0
    %536 = vmatpush1.bf16.msra.mxu0 %v489
    %537 = vmatprep.subr.bf16.mxu0 0
    %538 = vmatpush2.bf16.msra.mxu0 %v504
    %539 = vmatprep.subr.bf16.mxu0 0
    %540 = vmatpush2.bf16.msra.mxu0 %v503
    %541 = vmatprep.subr.bf16.mxu0 0
    %542 = vmatpush2.bf16.msra.mxu0 %v502
    %543 = vmatprep.subr.bf16.mxu0 0
    %544 = vmatpush2.bf16.msra.mxu0 %v501
    %545 = vmatprep.subr.bf16.mxu0 0
    %546 = vmatpush2.bf16.msra.mxu0 %v500
    %547 = vmatprep.subr.bf16.mxu0 0
    %548 = vmatpush2.bf16.msra.mxu0 %v499
    %549 = vmatprep.subr.bf16.mxu0 0
    %550 = vmatpush2.bf16.msra.mxu0 %v498
    %551 = vmatprep.subr.bf16.mxu0 0
    %552 = vmatpush2.bf16.msra.mxu0 %v497
    %553 = vmatprep.mubr.bf16.mxu0 %v385
    %554 = vmatmul.mubr.bf16.gmra.mxu0 %v384
    %v555 = vpop.f32.mrf.mxu0
    %v556 = vadd.f32 %v423, %v555
    %v557 = vpop.f32.mrf.mxu0
    %v558 = vpop.f32.mrf.mxu0
    %v559 = vpop.f32.mrf.mxu0
    %560 = vdwg.mxu0
    %vm561 = vcmask 64512
    %562 = vst.msk [vmem:[#allocation5] sm:$0xff] %vm561, %v556
    // Predicated region
    $region34: #{dqn_forward.1} parent=1 // pred_check
      _
    $region35: #{dqn_forward.1} parent=1 // pred_check_branch
      %564 = sbr.rel (0) target = $region37
    $region36: #{dqn_forward.1} parent=1 // pred_region
      %s566 = ssub.s32 128, 128
      %567 = vsyncadd [#allocation4], %s566
      %s569 = sshll.u32 [#allocation5], 4
      %s570 = int_to_ptr.vmem [resolvable:$true] %s569
      %572 = dma.vmem_to_hbm [thread:$0]  %s570, 128, %s7, [#allocation4]
    $region37: #{dqn_forward.1} parent=1 // pred_fallthru
      _
    // Predicated region
    $region38: #{dqn_forward.1} parent=1 // pred_check
      _
    $region39: #{dqn_forward.1} parent=1 // pred_check_branch
      %574 = sbr.rel (0) target = $region41
    $region40: #{dqn_forward.1} parent=1 // pred_region
      %575 = dma.done [#allocation4], 128
    $region41: #{dqn_forward.1} parent=1 // pred_fallthru
      _
    %576 = vsyncpa [#allocation3], 1
    %577 = vsyncpa [#allocation4], 1

</llo_original>
